<compile_context>
chip_gen: v5e
topology: v5e:2x2
jax: 0.10.0
libtpu: 0.0.40
codegen_flags: <defaults>
</compile_context>

<pallas_src>
import functools

import jax
import jax.numpy as jnp
import numpy as np
from jax.experimental import pallas as pl
from jax.experimental.pallas import tpu as pltpu


def _aa_kernel(a_ref, b_ref, x_ref, o_ref, t_ref):
    """One grid step: `pb` image planes -> blurred + subsampled planes.

    a_ref: (H_out, H)   f32  vertical blur + row-subsample band matrix
    b_ref: (W, W_out)   f32  horizontal blur + col-subsample band matrix
    x_ref: (pb, H, W)        input planes, native dtype (one per (n, c))
    o_ref: (pb, H_out, W_out) output planes, native dtype
    t_ref: (pb*H_out, W) f32 scratch: A-side results for all planes
    """
    pb = x_ref.shape[0]
    h_out = a_ref.shape[0]
    a = a_ref[...]

    def a_side(p, carry):
        # Cast happens in VMEM (per plane), never as a full-size HBM copy.
        xp = x_ref[p].astype(jnp.float32)
        row0 = p * h_out
        if h_out % 8 == 0:
            row0 = pl.multiple_of(row0, h_out)
        t_ref[pl.ds(row0, h_out), :] = jnp.dot(
            a, xp, preferred_element_type=jnp.float32)
        return carry

    jax.lax.fori_loop(0, pb, a_side, 0, unroll=pb <= 8)

    # One big MXU matmul for the B side: M = pb*H_out amortizes fill/drain.
    out = jnp.dot(t_ref[...], b_ref[...], preferred_element_type=jnp.float32)
    o_ref[...] = out.reshape(o_ref.shape).astype(o_ref.dtype)


def _gaussian_1d(scale):
    """Normalized 1-D Gaussian taps exactly as the PyTorch module builds them."""
    sigma = (1.0 / scale - 1.0) / 2.0
    kernel_size = 2 * round(sigma * 4) + 1
    ka = kernel_size // 2
    coords = np.arange(kernel_size, dtype=np.float64)
    mean = (kernel_size - 1) / 2.0
    g = np.exp(-((coords - mean) ** 2) / (2.0 * sigma ** 2))
    # outer(g, g) / sum(outer(g, g)) == outer(g/sum(g), g/sum(g)) -> separable
    g = g / np.sum(g)
    return g.astype(np.float32), ka


def _band_matrix(n_full, n_sub, g, ka, stride):
    """M[i, j] = g[i - j*stride + ka] inside the band, else 0. Shape (n_full, n_sub)."""
    k = g.shape[0]
    idx = (np.arange(n_full)[:, None] - stride * np.arange(n_sub)[None, :] + ka)
    valid = (idx >= 0) & (idx < k)
    return np.where(valid, g[np.clip(idx, 0, k - 1)], 0.0).astype(np.float32)


@functools.partial(jax.jit, static_argnums=(1,))
def anti_alias_interpolation2d(x, scale):
    """Forward pass of AntiAliasInterpolation2d.  x: (N, C, H, W) float."""
    if scale == 1.0:
        return x

    N, C, H, W = x.shape
    s = int(1.0 / scale)
    g, ka = _gaussian_1d(scale)
    H_out = -(-H // s)          # == len(range(0, H, s))
    W_out = -(-W // s)

    A = jnp.asarray(_band_matrix(H, H_out, g, ka, s).T)    # (H_out, H), f32 const
    B = jnp.asarray(_band_matrix(W, W_out, g, ka, s))      # (W, W_out), f32 const

    planes = N * C
    xf = x.reshape(planes, H, W)           # native dtype; no HBM upcast

    bx = int(x.dtype.itemsize)
    bo = bx

    # ---- block-size (pb planes per grid step) selection -------------------
    try:
        vmem_cap = int(pltpu.get_tpu_info().vmem_capacity_bytes)
    except Exception:
        vmem_cap = 64 * 1024 * 1024        # conservative (v7x per-TC)
    vmem_cap = max(vmem_cap, 32 * 1024 * 1024)

    # Raw input block ~1/6 of VMEM (~10 MiB on v7x, ~21 MiB on v5e/v6e); the
    # fully double-buffered footprint then stays well inside the budget.
    target_block_bytes = vmem_cap // 6
    pb_cap = max(1, target_block_bytes // (H * W * bx))
    num_blocks = pl.cdiv(planes, pb_cap)
    if planes >= 2:
        num_blocks = max(num_blocks, 2)    # >=2 grid steps: keeps both v7x TCs busy
    num_blocks = min(num_blocks, planes)
    pb = pl.cdiv(planes, num_blocks)       # balanced blocks; ragged tail handled
    grid = (pl.cdiv(planes, pb),)

    # ---- honest VMEM accounting (2x buffers for every pipelined operand) ---
    vmem_needed = (2 * pb * H * W * bx                    # input block  x2
                   + 2 * pb * H_out * W_out * bo          # output block x2
                   + 2 * 4 * (H_out * H + W * W_out)      # A, B         x2
                   + 4 * pb * H_out * W                   # t scratch (f32)
                   + 4 * pb * H_out * W_out               # f32 result pre-cast
                   + 4 * H * W)                           # per-plane f32 temp
    vmem_limit = min(int(vmem_needed * 1.25) + (2 << 20),
                     vmem_cap - (8 << 20))                # keep compiler headroom
    vmem_limit = max(vmem_limit, min(16 << 20, vmem_cap - (8 << 20)))

    flops = int(2 * planes * (H_out * H * W + H_out * W * W_out))
    bytes_accessed = int(planes * H * W * bx + planes * H_out * W_out * bo
                         + 4 * (H_out * H + W * W_out))

    out = pl.pallas_call(
        _aa_kernel,
        out_shape=jax.ShapeDtypeStruct((planes, H_out, W_out), x.dtype),
        grid_spec=pltpu.PrefetchScalarGridSpec(
            num_scalar_prefetch=0,
            grid=grid,
            in_specs=[
                pl.BlockSpec((H_out, H), lambda i: (0, 0)),      # A (grid-constant)
                pl.BlockSpec((W, W_out), lambda i: (0, 0)),      # B (grid-constant)
                pl.BlockSpec((pb, H, W), lambda i: (i, 0, 0)),   # input planes
            ],
            out_specs=pl.BlockSpec((pb, H_out, W_out), lambda i: (i, 0, 0)),
            scratch_shapes=[pltpu.VMEM((pb * H_out, W), jnp.float32)],
        ),
        compiler_params=pltpu.CompilerParams(
            dimension_semantics=("parallel",),
            vmem_limit_bytes=int(vmem_limit),
        ),
        cost_estimate=pl.CostEstimate(flops=flops, transcendentals=0,
                                      bytes_accessed=bytes_accessed),
    )(A, B, xf)

    return out.reshape(N, C, H_out, W_out)


def _reference(x, scale):
    """Pure-JAX mirror of the PyTorch module (pad + depthwise conv + subsample)."""
    if scale == 1.0:
        return x
    sigma = (1.0 / scale - 1.0) / 2.0
    k = 2 * round(sigma * 4) + 1
    ka = k // 2
    kb = ka if k % 2 == 1 else ka - 1
    coords = jnp.arange(k, dtype=jnp.float32)
    mean = (k - 1) / 2.0
    g1 = jnp.exp(-((coords - mean) ** 2) / (2.0 * sigma ** 2))
    kern2d = g1[:, None] * g1[None, :]
    kern2d = kern2d / jnp.sum(kern2d)
    N, C, H, W = x.shape
    xp = jnp.pad(x.astype(jnp.float32), ((0, 0), (0, 0), (ka, kb), (ka, kb)))
    w = jnp.broadcast_to(kern2d, (C, 1, k, k)).astype(jnp.float32)
    out = jax.lax.conv_general_dilated(
        xp, w, window_strides=(1, 1), padding="VALID",
        dimension_numbers=("NCHW", "OIHW", "NCHW"),
        feature_group_count=C)
    s = int(1.0 / scale)
    return out[:, :, ::s, ::s]


if __name__ == "__main__":
    key = jax.random.PRNGKey(0)
    k1, k2, k3 = jax.random.split(key, 3)

    # Case 1: scale=0.5 -> 5x5 Gaussian, stride-2 subsample.
    x1 = jax.random.normal(k1, (2, 4, 16, 16), dtype=jnp.float32)
    out1 = jax.block_until_ready(anti_alias_interpolation2d(x1, 0.5))
    ref1 = jax.block_until_ready(_reference(x1, 0.5))
    assert out1.shape == (2, 4, 8, 8), out1.shape
    assert jnp.allclose(out1, ref1, atol=1e-4, rtol=1e-4), float(jnp.max(jnp.abs(out1 - ref1)))

    # Case 2: scale=0.25 -> 13x13 Gaussian, stride-4, non-divisible sizes,
    # odd plane count (exercises the ragged last block).
    x2 = jax.random.normal(k2, (1, 3, 18, 22), dtype=jnp.float32)
    out2 = jax.block_until_ready(anti_alias_interpolation2d(x2, 0.25))
    ref2 = jax.block_until_ready(_reference(x2, 0.25))
    assert out2.shape == (1, 3, 5, 6), out2.shape
    assert jnp.allclose(out2, ref2, atol=1e-4, rtol=1e-4), float(jnp.max(jnp.abs(out2 - ref2)))

    # Case 3: scale == 1.0 is the identity (module returns input unchanged).
    out3 = jax.block_until_ready(anti_alias_interpolation2d(x1, 1.0))
    assert jnp.array_equal(out3, x1)

    # Case 4: bf16 input -> native-dtype I/O path (no f32 HBM copies).
    x4 = jax.random.normal(k3, (2, 3, 16, 16), dtype=jnp.float32).astype(jnp.bfloat16)
    out4 = jax.block_until_ready(anti_alias_interpolation2d(x4, 0.5))
    ref4 = jax.block_until_ready(_reference(x4.astype(jnp.float32), 0.5))
    assert out4.dtype == jnp.bfloat16 and out4.shape == (2, 3, 8, 8)
    assert jnp.allclose(out4.astype(jnp.float32), ref4, atol=2e-2, rtol=2e-2), \
        float(jnp.max(jnp.abs(out4.astype(jnp.float32) - ref4)))

    print("KERNEL_OK")
</pallas_src>

<mosaic_0001>
module attributes {stable_mosaic.version = 11 : i64} {
  func.func @_aa_kernel(%arg0: i32, %arg1: memref<8x16xf32, #tpu.memory_space<vmem>>, %arg2: memref<16x8xf32, #tpu.memory_space<vmem>>, %arg3: memref<4x16x16xf32, #tpu.memory_space<vmem>>, %arg4: memref<4x8x8xf32, #tpu.memory_space<vmem>>, %arg5: memref<32x16xf32, #tpu.memory_space<vmem>>) attributes {dimension_semantics = [#tpu.dimension_semantics<parallel>], iteration_bounds = array<i64: 2>, scalar_prefetch = 0 : i64, scratch_operands = 1 : i64, tpu.core_type = #tpu.core_type<tc>, window_params = [{pipeline_mode = #tpu.pipeline_mode<synchronous>, transform_indices = @transform_0, window_bounds = array<i64: 8, 16>}, {pipeline_mode = #tpu.pipeline_mode<synchronous>, transform_indices = @transform_1, window_bounds = array<i64: 16, 8>}, {transform_indices = @transform_2, window_bounds = array<i64: 4, 16, 16>}, {transform_indices = @transform_3, window_bounds = array<i64: 4, 8, 8>}]} {
    %c0 = arith.constant 0 : index
    %c0_0 = arith.constant 0 : index
    %0 = vector.load %arg1[%c0, %c0_0] : memref<8x16xf32, #tpu.memory_space<vmem>>, vector<8x16xf32>
    %c0_i32 = arith.constant 0 : i32
    %1 = arith.index_cast %c0_i32 : i32 to index
    %c0_1 = arith.constant 0 : index
    %c0_2 = arith.constant 0 : index
    %2 = vector.load %arg3[%1, %c0_1, %c0_2] : memref<4x16x16xf32, #tpu.memory_space<vmem>>, vector<1x16x16xf32>
    %3 = vector.shape_cast %2 : vector<1x16x16xf32> to vector<16x16xf32>
    %c8_i32 = arith.constant 8 : i32
    %4 = arith.muli %c0_i32, %c8_i32 : i32
    %5 = tpu.assume_multiple %4, 8 : i32
    %cst = arith.constant dense<0.000000e+00> : vector<8x16xf32>
    %6 = tpu.matmul %0, %3, %cst {dimension_numbers = #tpu.dot_dimension_numbers<[1], [0], [0], [1], [0, 0, 1, 1], [], []>} : vector<8x16xf32>, vector<16x16xf32>, vector<8x16xf32> -> vector<8x16xf32>
    %7 = arith.index_cast %5 : i32 to index
    %c0_3 = arith.constant 0 : index
    %8 = vector.load %arg5[%7, %c0_3] : memref<32x16xf32, #tpu.memory_space<vmem>>, vector<8x16xf32>
    tpu.vector_store %arg5[%7, %c0_3], %6 {strides = array<i32>} : memref<32x16xf32, #tpu.memory_space<vmem>>, vector<8x16xf32>,
    %c1_i32 = arith.constant 1 : i32
    %9 = arith.index_cast %c1_i32 : i32 to index
    %c0_4 = arith.constant 0 : index
    %c0_5 = arith.constant 0 : index
    %10 = vector.load %arg3[%9, %c0_4, %c0_5] : memref<4x16x16xf32, #tpu.memory_space<vmem>>, vector<1x16x16xf32>
    %11 = vector.shape_cast %10 : vector<1x16x16xf32> to vector<16x16xf32>
    %c8_i32_6 = arith.constant 8 : i32
    %12 = arith.muli %c1_i32, %c8_i32_6 : i32
    %13 = tpu.assume_multiple %12, 8 : i32
    %cst_7 = arith.constant dense<0.000000e+00> : vector<8x16xf32>
    %14 = tpu.matmul %0, %11, %cst_7 {dimension_numbers = #tpu.dot_dimension_numbers<[1], [0], [0], [1], [0, 0, 1, 1], [], []>} : vector<8x16xf32>, vector<16x16xf32>, vector<8x16xf32> -> vector<8x16xf32>
    %15 = arith.index_cast %13 : i32 to index
    %c0_8 = arith.constant 0 : index
    %16 = vector.load %arg5[%15, %c0_8] : memref<32x16xf32, #tpu.memory_space<vmem>>, vector<8x16xf32>
    tpu.vector_store %arg5[%15, %c0_8], %14 {strides = array<i32>} : memref<32x16xf32, #tpu.memory_space<vmem>>, vector<8x16xf32>,
    %c2_i32 = arith.constant 2 : i32
    %17 = arith.index_cast %c2_i32 : i32 to index
    %c0_9 = arith.constant 0 : index
    %c0_10 = arith.constant 0 : index
    %18 = vector.load %arg3[%17, %c0_9, %c0_10] : memref<4x16x16xf32, #tpu.memory_space<vmem>>, vector<1x16x16xf32>
    %19 = vector.shape_cast %18 : vector<1x16x16xf32> to vector<16x16xf32>
    %c8_i32_11 = arith.constant 8 : i32
    %20 = arith.muli %c2_i32, %c8_i32_11 : i32
    %21 = tpu.assume_multiple %20, 8 : i32
    %cst_12 = arith.constant dense<0.000000e+00> : vector<8x16xf32>
    %22 = tpu.matmul %0, %19, %cst_12 {dimension_numbers = #tpu.dot_dimension_numbers<[1], [0], [0], [1], [0, 0, 1, 1], [], []>} : vector<8x16xf32>, vector<16x16xf32>, vector<8x16xf32> -> vector<8x16xf32>
    %23 = arith.index_cast %21 : i32 to index
    %c0_13 = arith.constant 0 : index
    %24 = vector.load %arg5[%23, %c0_13] : memref<32x16xf32, #tpu.memory_space<vmem>>, vector<8x16xf32>
    tpu.vector_store %arg5[%23, %c0_13], %22 {strides = array<i32>} : memref<32x16xf32, #tpu.memory_space<vmem>>, vector<8x16xf32>,
    %c3_i32 = arith.constant 3 : i32
    %25 = arith.index_cast %c3_i32 : i32 to index
    %c0_14 = arith.constant 0 : index
    %c0_15 = arith.constant 0 : index
    %26 = vector.load %arg3[%25, %c0_14, %c0_15] : memref<4x16x16xf32, #tpu.memory_space<vmem>>, vector<1x16x16xf32>
    %27 = vector.shape_cast %26 : vector<1x16x16xf32> to vector<16x16xf32>
    %c8_i32_16 = arith.constant 8 : i32
    %28 = arith.muli %c3_i32, %c8_i32_16 : i32
    %29 = tpu.assume_multiple %28, 8 : i32
    %cst_17 = arith.constant dense<0.000000e+00> : vector<8x16xf32>
    %30 = tpu.matmul %0, %27, %cst_17 {dimension_numbers = #tpu.dot_dimension_numbers<[1], [0], [0], [1], [0, 0, 1, 1], [], []>} : vector<8x16xf32>, vector<16x16xf32>, vector<8x16xf32> -> vector<8x16xf32>
    %31 = arith.index_cast %29 : i32 to index
    %c0_18 = arith.constant 0 : index
    %32 = vector.load %arg5[%31, %c0_18] : memref<32x16xf32, #tpu.memory_space<vmem>>, vector<8x16xf32>
    tpu.vector_store %arg5[%31, %c0_18], %30 {strides = array<i32>} : memref<32x16xf32, #tpu.memory_space<vmem>>, vector<8x16xf32>,
    %c4_i32 = arith.constant 4 : i32
    %c0_19 = arith.constant 0 : index
    %c0_20 = arith.constant 0 : index
    %33 = vector.load %arg5[%c0_19, %c0_20] : memref<32x16xf32, #tpu.memory_space<vmem>>, vector<32x16xf32>
    %c0_21 = arith.constant 0 : index
    %c0_22 = arith.constant 0 : index
    %34 = vector.load %arg2[%c0_21, %c0_22] : memref<16x8xf32, #tpu.memory_space<vmem>>, vector<16x8xf32>
    %cst_23 = arith.constant dense<0.000000e+00> : vector<32x8xf32>
    %35 = tpu.matmul %33, %34, %cst_23 {dimension_numbers = #tpu.dot_dimension_numbers<[1], [0], [0], [1], [0, 0, 1, 1], [], []>} : vector<32x16xf32>, vector<16x8xf32>, vector<32x8xf32> -> vector<32x8xf32>
    %36 = vector.shape_cast %35 : vector<32x8xf32> to vector<4x8x8xf32>
    %c0_24 = arith.constant 0 : index
    %c0_25 = arith.constant 0 : index
    %c0_26 = arith.constant 0 : index
    %37 = vector.load %arg4[%c0_24, %c0_25, %c0_26] : memref<4x8x8xf32, #tpu.memory_space<vmem>>, vector<4x8x8xf32>
    tpu.vector_store %arg4[%c0_24, %c0_25, %c0_26], %36 {strides = array<i32>} : memref<4x8x8xf32, #tpu.memory_space<vmem>>, vector<4x8x8xf32>,
    return
  }
  func.func @transform_0(%arg0: i32) -> (i32, i32) {
    %c0_i32 = arith.constant 0 : i32
    %c0_i32_0 = arith.constant 0 : i32
    %c0_i32_1 = arith.constant 0 : i32
    return %c0_i32, %c0_i32_0 : i32, i32
  }
  func.func @transform_1(%arg0: i32) -> (i32, i32) {
    %c0_i32 = arith.constant 0 : i32
    %c0_i32_0 = arith.constant 0 : i32
    %c0_i32_1 = arith.constant 0 : i32
    return %c0_i32, %c0_i32_0 : i32, i32
  }
  func.func @transform_2(%arg0: i32) -> (i32, i32, i32) {
    %c0_i32 = arith.constant 0 : i32
    %c0_i32_0 = arith.constant 0 : i32
    %c0_i32_1 = arith.constant 0 : i32
    return %arg0, %c0_i32, %c0_i32_0 : i32, i32, i32
  }
  func.func @transform_3(%arg0: i32) -> (i32, i32, i32) {
    %c0_i32 = arith.constant 0 : i32
    %c0_i32_0 = arith.constant 0 : i32
    %c0_i32_1 = arith.constant 0 : i32
    return %arg0, %c0_i32, %c0_i32_0 : i32, i32, i32
  }
}

</mosaic_0001>

<llo_original>
// kernel: anti_alias_interpolation2d.1
$region0: #{anti_alias_interpolation2d.1}
  #allocation0 [shape = 'u32[]', space=smem, size = 0x4, offset = 0x4, fixed_abs, tag = 'smem constant byte address 0x4 - core index']
  #allocation1 [shape = 'u32[72,128]{1,0:T(1,128)}', space=vmem, size = 0x9000, scoped, tag = 'internal scratch']
  #allocation2 [shape = 'f32[32,16]{1,0:T(8,128)}', space=vmem, size = 0x4000, scoped, tag = 'scratch operand']
  %s0 = inlined_call_operand.hbm [shape: f32[8,16], index: 0, kind: input, shape index: {}]
  %s1 = inlined_call_operand.hbm [shape: f32[16,8], index: 1, kind: input, shape index: {}]
  %s2 = inlined_call_operand.hbm [shape: f32[8,16,16], index: 2, kind: input, shape index: {}]
  %s3 = inlined_call_operand.hbm [shape: f32[8,8,8], index: 3, kind: output, shape index: {}]
  %s4 = sld [smem:[#allocation0]]
  $region57: #{anti_alias_interpolation2d.1} parent=0
    _
  %s6 = ssub.s32 1, %s4
  %s7 = scalar_select 0, %s6, %s4
  $region1: #{anti_alias_interpolation2d.1} parent=0
    #allocation3 [shape = 'u8[4096]{0}', space=vmem, size = 0x1000, scoped, tag = 'input window, operand 0, single buffered']
    #allocation4 [shape = 's32[2]{0}', space=sflag, size = 0x8, scoped, tag = 'scoped memory for anti_alias_interpolation2d.1']
    #allocation5 [shape = 's32[2]{0}', space=sflag, size = 0x8, scoped, tag = 'scoped memory for anti_alias_interpolation2d.1']
    #allocation6 [shape = 'u8[8192]{0}', space=vmem, size = 0x2000, scoped, tag = 'input window, operand 1, single buffered']
    #allocation7 [shape = 's32[1]{0}', space=sflag, size = 0x4, scoped, tag = 'scoped memory for anti_alias_interpolation2d.1']
    #allocation8 [shape = 'u8[65536]{0}', space=vmem, size = 0x10000, scoped, tag = 'input window, operand 2']
    #allocation9 [shape = 'u8[32768]{0}', space=vmem, size = 0x8000, scoped, tag = 'output window, operand 0']
    %8 = vsyncpa [#allocation4], 0
    %9 = vsyncpa [#allocation7], 0
    %10 = vsyncpa [#allocation5], 0
    %s11 = scalar_lea.sflag [#allocation5], 1
    %12 = vsyncpa %s11, 0
    loop: start=0, step=1, limit=4
    $region2: #{anti_alias_interpolation2d.1} parent=1 // loop_pre_header
      _
    $region3: #{anti_alias_interpolation2d.1} parent=1 // loop_header
      %s14 = sphi 0, %s18
      %p15 = scmp.ge.s32.totalorder %s14, 4
      %s22 = sphi 0, %s22
      %s24 = sphi 0, %s22
      %s25 = sphi 0, %s24
      %s39 = sphi 0, %s25
      %s43 = sphi 0, %s43
      %s45 = sphi 0, %s43
      %s46 = sphi 0, %s45
      %s60 = sphi 0, %s46
      %s66 = sphi 0, %s68
      %s69 = sphi 0, %s66
      %s70 = sphi 0, %s69
      %s86 = sphi 0, %s70
      %s92 = sphi 0, %s94
      %s95 = sphi 0, %s92
      %s96 = sphi 0, %s95
      %s112 = sphi 0, %s96
    $region4: #{anti_alias_interpolation2d.1} parent=1 // loop_header_branch
      %17 = sbr.rel (%p15) target = $region8
    $region5: #{anti_alias_interpolation2d.1} parent=1 // loop_body
      %s19 = ssub.s32 %s14, 1
      %s20 = ssub.s32 %s14, 2
      %s21 = sadd.s32 %s14, 1
      %s23 = sadd.s32 %s22, 1
      %p26 = scmp.eq.s32.totalorder %s14, 1
      %p27 = scmp.ne.s32.totalorder %s22, %s24
      %p28 = scmp.eq.s32.totalorder %s14, 0
      %p29 = por %p27, %p28
      %p30 = scmp.ne.s32.totalorder %s22, %s24
      %p31 = scmp.eq.s32.totalorder %s19, 1
      %p32 = por %p30, %p31
      %p33 = scmp.ne.s32.totalorder %s24, %s25
      %p34 = scmp.eq.s32.totalorder %s19, 0
      %p35 = por %p33, %p34
      %p36 = scmp.ne.s32.totalorder %s24, %s25
      %p37 = scmp.eq.s32.totalorder %s20, 1
      %p38 = por %p36, %p37
      %p40 = scmp.ne.s32.totalorder %s25, %s39
      %p41 = scmp.eq.s32.totalorder %s20, 0
      %p42 = por %p40, %p41
      %s44 = sadd.s32 %s43, 1
      %p47 = scmp.eq.s32.totalorder %s14, 1
      %p48 = scmp.ne.s32.totalorder %s43, %s45
      %p49 = scmp.eq.s32.totalorder %s14, 0
      %p50 = por %p48, %p49
      %p51 = scmp.ne.s32.totalorder %s43, %s45
      %p52 = scmp.eq.s32.totalorder %s19, 1
      %p53 = por %p51, %p52
      %p54 = scmp.ne.s32.totalorder %s45, %s46
      %p55 = scmp.eq.s32.totalorder %s19, 0
      %p56 = por %p54, %p55
      %p57 = scmp.ne.s32.totalorder %s45, %s46
      %p58 = scmp.eq.s32.totalorder %s20, 1
      %p59 = por %p57, %p58
      %p61 = scmp.ne.s32.totalorder %s46, %s60
      %p62 = scmp.eq.s32.totalorder %s20, 0
      %p63 = por %p61, %p62
      %s64 = ssub.s32 %s14, %s21
      %p65 = scmp.eq.s32.totalorder %s64, 0
      %s67 = sadd.s32 %s66, 1
      %s68 = scalar_select %p65, %s66, %s67
      %p71 = pneg %p65
      %p72 = scmp.eq.s32.totalorder %s14, 1
      %p73 = por %p71, %p72
      %p74 = scmp.ne.s32.totalorder %s66, %s69
      %p75 = scmp.eq.s32.totalorder %s14, 0
      %p76 = por %p74, %p75
      %p77 = scmp.ne.s32.totalorder %s66, %s69
      %p78 = scmp.eq.s32.totalorder %s19, 1
      %p79 = por %p77, %p78
      %p80 = scmp.ne.s32.totalorder %s69, %s70
      %p81 = scmp.eq.s32.totalorder %s19, 0
      %p82 = por %p80, %p81
      %p83 = scmp.ne.s32.totalorder %s69, %s70
      %p84 = scmp.eq.s32.totalorder %s20, 1
      %p85 = por %p83, %p84
      %p87 = scmp.ne.s32.totalorder %s70, %s86
      %p88 = scmp.eq.s32.totalorder %s20, 0
      %p89 = por %p87, %p88
      %s90 = ssub.s32 %s14, %s21
      %p91 = scmp.eq.s32.totalorder %s90, 0
      %s93 = sadd.s32 %s92, 1
      %s94 = scalar_select %p91, %s92, %s93
      %p97 = pneg %p91
      %p98 = scmp.eq.s32.totalorder %s14, 1
      %p99 = por %p97, %p98
      %p100 = scmp.ne.s32.totalorder %s92, %s95
      %p101 = scmp.eq.s32.totalorder %s14, 0
      %p102 = por %p100, %p101
      %p103 = scmp.ne.s32.totalorder %s92, %s95
      %p104 = scmp.eq.s32.totalorder %s19, 1
      %p105 = por %p103, %p104
      %p106 = scmp.ne.s32.totalorder %s95, %s96
      %p107 = scmp.eq.s32.totalorder %s19, 0
      %p108 = por %p106, %p107
      %p109 = scmp.ne.s32.totalorder %s95, %s96
      %p110 = scmp.eq.s32.totalorder %s20, 1
      %p111 = por %p109, %p110
      %p113 = scmp.ne.s32.totalorder %s96, %s112
      %p114 = scmp.eq.s32.totalorder %s20, 0
      %p115 = por %p113, %p114
      %p116 = scmp.le.s32.totalorder 1, %s14
      %p117 = scmp.lt.s32.totalorder %s14, 3
      %p118 = pnand %p116, %p117
      %p119 = pneg %p118
      // Predicated region
      $region9: #{anti_alias_interpolation2d.1} parent=5 // pred_check
        _
      $region10: #{anti_alias_interpolation2d.1} parent=5 // pred_check_branch
        %121 = sbr.rel (%p118) target = $region12
      $region11: #{anti_alias_interpolation2d.1} parent=5 // pred_region
        %s122 = ssub.s32 %s14, 1
        // Predicated region
        $region13: #{anti_alias_interpolation2d.1} parent=11 // pred_check
          %p123 = pneg %p35
        $region14: #{anti_alias_interpolation2d.1} parent=11 // pred_check_branch
          %125 = sbr.rel (%p123) target = $region16
        $region15: #{anti_alias_interpolation2d.1} parent=11 // pred_region
          %127 = vsyncadd [#allocation4], 0
          %s129 = sshll.u32 %s0, 4
          %s130 = int_to_ptr.hbm [resolvable:$true] %s129
          %s131 = sshll.u32 [#allocation3], 4
          %s132 = int_to_ptr.vmem [resolvable:$true] %s131
          %134 = dma.hbm_to_vmem [thread:$0]  %s130, 128, %s132, [#allocation4]
        $region16: #{anti_alias_interpolation2d.1} parent=11 // pred_fallthru
          _
        // Predicated region
        $region17: #{anti_alias_interpolation2d.1} parent=11 // pred_check
          %p135 = pneg %p56
        $region18: #{anti_alias_interpolation2d.1} parent=11 // pred_check_branch
          %137 = sbr.rel (%p135) target = $region20
        $region19: #{anti_alias_interpolation2d.1} parent=11 // pred_region
          %139 = vsyncadd [#allocation7], 0
          %s140 = sshll.u32 %s1, 4
          %s141 = int_to_ptr.hbm [resolvable:$true] %s140
          %s142 = sshll.u32 [#allocation6], 4
          %s143 = int_to_ptr.vmem [resolvable:$true] %s142
          %148 = dma.hbm_to_vmem [thread:$0]  %s141, 256, %s143, [#allocation7], 128, 128, 8
        $region20: #{anti_alias_interpolation2d.1} parent=11 // pred_fallthru
          _
      $region12: #{anti_alias_interpolation2d.1} parent=5 // pred_fallthru
        _
      %p149 = scmp.lt.s32.totalorder %s14, 2
      // Predicated region
      $region21: #{anti_alias_interpolation2d.1} parent=5 // pred_check
        %p150 = pneg %p149
      $region22: #{anti_alias_interpolation2d.1} parent=5 // pred_check_branch
        %152 = sbr.rel (%p150) target = $region24
      $region23: #{anti_alias_interpolation2d.1} parent=5 // pred_region
        // Predicated region
        $region25: #{anti_alias_interpolation2d.1} parent=23 // pred_check
          %p153 = pneg %p76
        $region26: #{anti_alias_interpolation2d.1} parent=23 // pred_check_branch
          %155 = sbr.rel (%p153) target = $region28
        $region27: #{anti_alias_interpolation2d.1} parent=23 // pred_region
          %s156 = sand.u32 %s14, 1
          %s157 = scalar_lea.sflag [#allocation4], %s156
          %s158 = sand.u32 %s66, 1
          %s159 = smul.addr %s158, 64
          %s160 = scalar_lea.vmem [#allocation8], %s159
          %s161 = smul.u32 4, %s14
          %163 = vsyncadd %s157, 0
          %s164 = smul.addr %s161, 2
          %s165 = smul.addr %s164, 8
          %s166 = scalar_lea.hbm %s2, %s165
          %s167 = sshll.u32 %s166, 4
          %s168 = int_to_ptr.hbm [resolvable:$true] %s167
          %s169 = sshll.u32 %s160, 4
          %s170 = int_to_ptr.vmem [resolvable:$true] %s169
          %175 = dma.hbm_to_vmem [thread:$0]  %s168, 1024, %s170, %s157, 128, 128, 8
        $region28: #{anti_alias_interpolation2d.1} parent=23 // pred_fallthru
          _
      $region24: #{anti_alias_interpolation2d.1} parent=5 // pred_fallthru
        _
      %p176 = scmp.le.s32.totalorder 1, %s14
      %p177 = scmp.lt.s32.totalorder %s14, 3
      %p178 = pnand %p176, %p177
      %p179 = pneg %p178
      // Predicated region
      $region29: #{anti_alias_interpolation2d.1} parent=5 // pred_check
        _
      $region30: #{anti_alias_interpolation2d.1} parent=5 // pred_check_branch
        %181 = sbr.rel (%p178) target = $region32
      $region31: #{anti_alias_interpolation2d.1} parent=5 // pred_region
        %s182 = ssub.s32 %s14, 1
        // Predicated region
        $region33: #{anti_alias_interpolation2d.1} parent=31 // pred_check
          %p183 = pneg %p35
        $region34: #{anti_alias_interpolation2d.1} parent=31 // pred_check_branch
          %185 = sbr.rel (%p183) target = $region36
        $region35: #{anti_alias_interpolation2d.1} parent=31 // pred_region
          %187 = dma.done [#allocation4], 128
        $region36: #{anti_alias_interpolation2d.1} parent=31 // pred_fallthru
          _
        // Predicated region
        $region37: #{anti_alias_interpolation2d.1} parent=31 // pred_check
          %p188 = pneg %p56
        $region38: #{anti_alias_interpolation2d.1} parent=31 // pred_check_branch
          %190 = sbr.rel (%p188) target = $region40
        $region39: #{anti_alias_interpolation2d.1} parent=31 // pred_region
          %192 = dma.done [#allocation7], 256
        $region40: #{anti_alias_interpolation2d.1} parent=31 // pred_fallthru
          _
        %s193 = sand.u32 %s19, 1
        %s194 = scalar_lea.sflag [#allocation4], %s193
        %s195 = sand.u32 %s69, 1
        %s196 = smul.addr %s195, 64
        %s197 = scalar_lea.vmem [#allocation8], %s196
        // Predicated region
        $region41: #{anti_alias_interpolation2d.1} parent=31 // pred_check
          %p198 = pneg %p82
        $region42: #{anti_alias_interpolation2d.1} parent=31 // pred_check_branch
          %200 = sbr.rel (%p198) target = $region44
        $region43: #{anti_alias_interpolation2d.1} parent=31 // pred_region
          %202 = dma.done %s194, 1024
        $region44: #{anti_alias_interpolation2d.1} parent=31 // pred_fallthru
          _
        %p203 = pneg %p35
        %p204 = pneg %p32
        %p205 = pneg %p56
        %p206 = pneg %p53
        %s207 = sand.u32 %s19, 1
        %s208 = scalar_lea.sflag [#allocation4], %s207
        %s209 = sand.u32 %s69, 1
        %s210 = smul.addr %s209, 64
        %s211 = scalar_lea.vmem [#allocation8], %s210
        %p212 = pneg %p82
        %p213 = pneg %p79
        %p214 = pneg %p108
        %p215 = pneg %p105
        %s216 = sand.u32 %s95, 1
        %s217 = scalar_lea.sflag [#allocation5], %s216
        %s218 = sand.u32 %s95, 1
        %s219 = smul.addr %s218, 32
        %s220 = scalar_lea.vmem [#allocation9], %s219
        %s221 = smul.u32 4, %s19
        %s222 = smul.u32 4, %s19
        %v223 = vld [vmem:[#allocation3] sm:$0xff]
        %v224 = vld [vmem:[%s197] sm:$0xff]
        %v225 = vld [vmem:[%s197 + $0x8] sm:$0xff]
        %vm226 = vcmask 130048
        %v228 = vsel %vm226, %v223, 0
        %230 = vmatpush.msra.mxu0 0.0
        %231 = vmatpush.msra.mxu0 0.0
        %232 = vmatpush.msra.mxu0 0.0
        %233 = vmatpush.msra.mxu0 0.0
        %234 = vmatpush.msra.mxu0 0.0
        %235 = vmatpush.msra.mxu0 0.0
        %236 = vmatpush.msra.mxu0 0.0
        %237 = vmatpush.msra.mxu0 0.0
        %238 = vmatpush.msra.mxu0 0.0
        %239 = vmatpush.msra.mxu0 0.0
        %240 = vmatpush.msra.mxu0 0.0
        %241 = vmatpush.msra.mxu0 0.0
        %242 = vmatpush.msra.mxu0 0.0
        %243 = vmatpush.msra.mxu0 0.0
        %244 = vmatpush.msra.mxu0 %v225
        %245 = vmatpush.msra.mxu0 %v224
        %246 = vmatmul.f32.gmra.mxu0 %v228
        %v247 = vpop.f32.mrf.mxu0
        %v248 = vadd.f32 0.0, %v247
        %249 = vdwg.mxu0
        %250 = vst.msk [vmem:[#allocation2] sm:$0xff] %vm226, %v248
        %s251 = scalar_lea.vmem %s197, 16 [#allocation8]
        %v252 = vld [vmem:[%s251] sm:$0xff]
        %v253 = vld [vmem:[%s251 + $0x8] sm:$0xff]
        %254 = vmatpush.msra.mxu0 0.0
        %255 = vmatpush.msra.mxu0 0.0
        %256 = vmatpush.msra.mxu0 0.0
        %257 = vmatpush.msra.mxu0 0.0
        %258 = vmatpush.msra.mxu0 0.0
        %259 = vmatpush.msra.mxu0 0.0
        %260 = vmatpush.msra.mxu0 0.0
        %261 = vmatpush.msra.mxu0 0.0
        %262 = vmatpush.msra.mxu0 0.0
        %263 = vmatpush.msra.mxu0 0.0
        %264 = vmatpush.msra.mxu0 0.0
        %265 = vmatpush.msra.mxu0 0.0
        %266 = vmatpush.msra.mxu0 0.0
        %267 = vmatpush.msra.mxu0 0.0
        %268 = vmatpush.msra.mxu0 %v253
        %269 = vmatpush.msra.mxu0 %v252
        %270 = vmatmul.f32.gmra.mxu0 %v228
        %v271 = vpop.f32.mrf.mxu0
        %v272 = vadd.f32 0.0, %v271
        %273 = vdwg.mxu0
        %s274 = scalar_lea.vmem [#allocation2], 8
        %275 = vst.msk [vmem:[%s274] sm:$0xff] %vm226, %v272
        %s276 = scalar_lea.vmem %s197, 32 [#allocation8]
        %v277 = vld [vmem:[%s276] sm:$0xff]
        %v278 = vld [vmem:[%s276 + $0x8] sm:$0xff]
        %279 = vmatpush.msra.mxu0 0.0
        %280 = vmatpush.msra.mxu0 0.0
        %281 = vmatpush.msra.mxu0 0.0
        %282 = vmatpush.msra.mxu0 0.0
        %283 = vmatpush.msra.mxu0 0.0
        %284 = vmatpush.msra.mxu0 0.0
        %285 = vmatpush.msra.mxu0 0.0
        %286 = vmatpush.msra.mxu0 0.0
        %287 = vmatpush.msra.mxu0 0.0
        %288 = vmatpush.msra.mxu0 0.0
        %289 = vmatpush.msra.mxu0 0.0
        %290 = vmatpush.msra.mxu0 0.0
        %291 = vmatpush.msra.mxu0 0.0
        %292 = vmatpush.msra.mxu0 0.0
        %293 = vmatpush.msra.mxu0 %v278
        %294 = vmatpush.msra.mxu0 %v277
        %295 = vmatmul.f32.gmra.mxu0 %v228
        %v296 = vpop.f32.mrf.mxu0
        %v297 = vadd.f32 0.0, %v296
        %298 = vdwg.mxu0
        %s299 = scalar_lea.vmem [#allocation2], 16
        %300 = vst.msk [vmem:[%s299] sm:$0xff] %vm226, %v297
        %s301 = scalar_lea.vmem %s197, 48 [#allocation8]
        %v302 = vld [vmem:[%s301] sm:$0xff]
        %v303 = vld [vmem:[%s301 + $0x8] sm:$0xff]
        %304 = vmatpush.msra.mxu0 0.0
        %305 = vmatpush.msra.mxu0 0.0
        %306 = vmatpush.msra.mxu0 0.0
        %307 = vmatpush.msra.mxu0 0.0
        %308 = vmatpush.msra.mxu0 0.0
        %309 = vmatpush.msra.mxu0 0.0
        %310 = vmatpush.msra.mxu0 0.0
        %311 = vmatpush.msra.mxu0 0.0
        %312 = vmatpush.msra.mxu0 0.0
        %313 = vmatpush.msra.mxu0 0.0
        %314 = vmatpush.msra.mxu0 0.0
        %315 = vmatpush.msra.mxu0 0.0
        %316 = vmatpush.msra.mxu0 0.0
        %317 = vmatpush.msra.mxu0 0.0
        %318 = vmatpush.msra.mxu0 %v303
        %319 = vmatpush.msra.mxu0 %v302
        %320 = vmatmul.f32.gmra.mxu0 %v228
        %v321 = vpop.f32.mrf.mxu0
        %v322 = vadd.f32 0.0, %v321
        %323 = vdwg.mxu0
        %s324 = scalar_lea.vmem [#allocation2], 24
        %325 = vst.msk [vmem:[%s324] sm:$0xff] %vm226, %v322
        %v326 = vld [vmem:[#allocation2] sm:$0xff]
        %v327 = vld [vmem:[#allocation2 + $0x8] sm:$0xff]
        %v328 = vld [vmem:[#allocation2 + $0x10] sm:$0xff]
        %v329 = vld [vmem:[#allocation2 + $0x18] sm:$0xff]
        %v330 = vld [vmem:[#allocation6] sm:$0xff]
        %v331 = vld [vmem:[#allocation6 + $0x8] sm:$0xff]
        %v333 = vsel %vm226, %v326, 0
        %v336 = vsel %vm226, %v327, 0
        %v339 = vsel %vm226, %v328, 0
        %v342 = vsel %vm226, %v329, 0
        %344 = vmatpush.msra.mxu0 0.0
        %345 = vmatpush.msra.mxu0 0.0
        %346 = vmatpush.msra.mxu0 0.0
        %347 = vmatpush.msra.mxu0 0.0
        %348 = vmatpush.msra.mxu0 0.0
        %349 = vmatpush.msra.mxu0 0.0
        %350 = vmatpush.msra.mxu0 0.0
        %351 = vmatpush.msra.mxu0 0.0
        %352 = vmatpush.msra.mxu0 0.0
        %353 = vmatpush.msra.mxu0 0.0
        %354 = vmatpush.msra.mxu0 0.0
        %355 = vmatpush.msra.mxu0 0.0
        %356 = vmatpush.msra.mxu0 0.0
        %357 = vmatpush.msra.mxu0 0.0
        %358 = vmatpush.msra.mxu0 %v331
        %359 = vmatpush.msra.mxu0 %v330
        %360 = vmatmul.f32.gmra.mxu0 %v333
        %v361 = vpop.f32.mrf.mxu0
        %v362 = vadd.f32 0.0, %v361
        %363 = vmatmul.f32.gmra.mxu0 %v336
        %v364 = vpop.f32.mrf.mxu0
        %v365 = vadd.f32 0.0, %v364
        %366 = vmatmul.f32.gmra.mxu0 %v339
        %v367 = vpop.f32.mrf.mxu0
        %v368 = vadd.f32 0.0, %v367
        %369 = vmatmul.f32.gmra.mxu0 %v342
        %v370 = vpop.f32.mrf.mxu0
        %v371 = vadd.f32 0.0, %v370
        %372 = vdwg.mxu0
        %vm373 = vcmask 64512
        %374 = vst.msk [vmem:[%s220] sm:$0xff] %vm373, %v362
        %375 = vst.msk [vmem:[%s220 + $0x8] sm:$0xff] %vm373, %v365
        %376 = vst.msk [vmem:[%s220 + $0x10] sm:$0xff] %vm373, %v368
        %377 = vst.msk [vmem:[%s220 + $0x18] sm:$0xff] %vm373, %v371
        %s378 = sand.u32 %s95, 1
        %s379 = scalar_lea.sflag [#allocation5], %s378
        %s380 = sand.u32 %s95, 1
        %s381 = smul.addr %s380, 32
        %s382 = scalar_lea.vmem [#allocation9], %s381
        // Predicated region
        $region45: #{anti_alias_interpolation2d.1} parent=31 // pred_check
          %p383 = pneg %p105
        $region46: #{anti_alias_interpolation2d.1} parent=31 // pred_check_branch
          %385 = sbr.rel (%p383) target = $region48
        $region47: #{anti_alias_interpolation2d.1} parent=31 // pred_region
          %s386 = smul.u32 4, %s19
          %388 = vsyncadd %s379, 0
          %s389 = smul.addr %s386, 8
          %s390 = scalar_lea.hbm %s3, %s389
          %s391 = sshll.u32 %s382, 4
          %s392 = int_to_ptr.vmem [resolvable:$true] %s391
          %s393 = sshll.u32 %s390, 4
          %s394 = int_to_ptr.hbm [resolvable:$true] %s393
          %399 = dma.vmem_to_hbm [thread:$0]  %s392, 512, %s394, %s379, 128, 128, 8
        $region48: #{anti_alias_interpolation2d.1} parent=31 // pred_fallthru
          _
      $region32: #{anti_alias_interpolation2d.1} parent=5 // pred_fallthru
        _
      %p400 = scmp.le.s32.totalorder 2, %s14
      // Predicated region
      $region49: #{anti_alias_interpolation2d.1} parent=5 // pred_check
        %p401 = pneg %p400
      $region50: #{anti_alias_interpolation2d.1} parent=5 // pred_check_branch
        %403 = sbr.rel (%p401) target = $region52
      $region51: #{anti_alias_interpolation2d.1} parent=5 // pred_region
        %s404 = ssub.s32 %s14, 2
        // Predicated region
        $region53: #{anti_alias_interpolation2d.1} parent=51 // pred_check
          %p405 = pneg %p111
        $region54: #{anti_alias_interpolation2d.1} parent=51 // pred_check_branch
          %407 = sbr.rel (%p405) target = $region56
        $region55: #{anti_alias_interpolation2d.1} parent=51 // pred_region
          %s408 = sand.u32 %s96, 1
          %s409 = scalar_lea.sflag [#allocation5], %s408
          %s410 = sand.u32 %s96, 1
          %s411 = smul.addr %s410, 32
          %s412 = scalar_lea.vmem [#allocation9], %s411
          %414 = dma.done %s409, 512
        $region56: #{anti_alias_interpolation2d.1} parent=51 // pred_fallthru
          _
      $region52: #{anti_alias_interpolation2d.1} parent=5 // pred_fallthru
        _
    $region6: #{anti_alias_interpolation2d.1} parent=1 // loop_footer
      %s18 = sadd.s32 1, %s14
    $region7: #{anti_alias_interpolation2d.1} parent=1 // loop_footer_branch
      %13 = sbr.rel target = $region3
    $region8: #{anti_alias_interpolation2d.1} parent=1 // loop_exit
      _
    %415 = vsyncpa [#allocation4], 1
    %s416 = scalar_lea.sflag [#allocation4], 1
    %417 = vsyncpa %s416, 1
    %418 = vsyncpa [#allocation7], 1
    %419 = vsyncpa [#allocation5], 1
    %s420 = scalar_lea.sflag [#allocation5], 1
    %421 = vsyncpa %s420, 1

</llo_original>
